<compile_context>
chip_gen: v6e
topology: v6e:2x2x1
jax: 0.10.0
libtpu: 0.0.40
codegen_flags: <defaults>
</compile_context>

<pallas_src>
import functools
import math

import jax
import jax.numpy as jnp
from jax.experimental import pallas as pl
from jax.experimental.pallas import tpu as pltpu

EPS = 1e-8
_LANE = 128
_SUBLANE = 8
_SMALL_2D_ELEMS = 1 << 20          # below this, a pallas_call is pure overhead


def _round_up(x, m):
    return ((x + m - 1) // m) * m


@functools.lru_cache(maxsize=1)
def _vmem_budget_bytes():
    """Generation-aware VMEM budget (headroom under physical capacity)."""
    cap = 64 * 1024 * 1024                       # conservative default (v7x)
    try:
        info = pltpu.get_tpu_info()
        cap = int(getattr(info, "vmem_capacity_bytes", cap)) or cap
    except Exception:
        pass
    # v7x (64 MiB) -> 40 MiB budget; v5e/v6e (128 MiB) -> 96 MiB budget.
    return max(16 * 1024 * 1024, min(cap - 24 * 1024 * 1024, (cap * 3) // 4))


def _largest_divisor_tile(n, cap, align):
    """Largest divisor of n that is a multiple of `align` and <= cap (0 if none)."""
    if cap >= n:
        return n
    for k in range(-(-n // cap), min(n, 4096) + 1):
        if n % k == 0:
            d = n // k
            if d % align == 0 and d <= cap:
                return d
    return 0


# ----------------------------- Pallas kernels -------------------------------

def _pixel_norm_channel_kernel(x_ref, o_ref):
    # Block is (C, TS): channels on sublanes, spatial on lanes (lane-dense).
    x = x_ref[...].astype(jnp.float32)                    # (C, TS)
    ms = jnp.mean(x * x, axis=0, keepdims=True)           # (1, TS)
    o_ref[...] = (x * jax.lax.rsqrt(ms + EPS)).astype(o_ref.dtype)


def _pixel_norm_row_kernel(x_ref, o_ref):
    # Block is (TM, C): per-row normalization over the last (feature) dim.
    x = x_ref[...].astype(jnp.float32)                    # (TM, C)
    ms = jnp.mean(x * x, axis=1, keepdims=True)           # (TM, 1)
    o_ref[...] = (x * jax.lax.rsqrt(ms + EPS)).astype(o_ref.dtype)


# ------------------------------- wrappers ------------------------------------

def _pixel_norm_fused(x):
    """Fused XLA fallback for tiny inputs (style vectors)."""
    xf = x.astype(jnp.float32)
    y = xf * jax.lax.rsqrt(jnp.mean(xf * xf, axis=1, keepdims=True) + EPS)
    return y.astype(x.dtype)


def _pixel_norm_nchw(x):
    """PixelNorm over dim=1 of an N-D (N>=3) NCHW-style array."""
    B, C = int(x.shape[0]), int(x.shape[1])
    S = int(math.prod(x.shape[2:]))
    xr = x.reshape(B, C, S)
    elem_bytes = jnp.dtype(xr.dtype).itemsize
    n_elems = B * C * S

    budget = _vmem_budget_bytes()
    block_cap_bytes = budget // 6          # in+out, double-buffered, + headroom
    ts_cap = max(_LANE,
                 (block_cap_bytes // max(C * elem_bytes, 1)) // _LANE * _LANE)

    if S <= ts_cap:
        TS = S                             # whole image per block (full dim -> legal)
    else:
        # Prefer a 128-aligned divisor of S (no ragged block); GPEN spatial
        # sizes are powers of two so this almost always succeeds.  Otherwise
        # fall back to a ragged cdiv grid: OOB columns only affect their own
        # (dropped) output columns.
        TS = _largest_divisor_tile(S, ts_cap, _LANE) or ts_cap
    n_s = pl.cdiv(S, TS)

    # Megacore: guarantee >=2 grid steps for big single-image calls.
    if B * n_s < 2 and S >= 2 * _LANE:
        TS = _round_up(-(-S // 2), _LANE)
        n_s = pl.cdiv(S, TS)

    block_bytes = C * TS * elem_bytes
    cost = pl.CostEstimate(flops=3 * n_elems,
                           transcendentals=B * S,
                           bytes_accessed=2 * n_elems * elem_bytes)

    y = pl.pallas_call(
        _pixel_norm_channel_kernel,
        grid=(B, n_s),
        in_specs=[pl.BlockSpec((pl.Squeezed(), C, TS), lambda b, s: (b, 0, s))],
        out_specs=pl.BlockSpec((pl.Squeezed(), C, TS), lambda b, s: (b, 0, s)),
        out_shape=jax.ShapeDtypeStruct((B, C, S), xr.dtype),
        compiler_params=pltpu.CompilerParams(
            dimension_semantics=("parallel", "parallel"),
            vmem_limit_bytes=int(min(budget, max(8 * 1024 * 1024, 6 * block_bytes)))),
        cost_estimate=cost,
    )(xr)
    return y.reshape(x.shape)


def _pixel_norm_2d(x):
    """PixelNorm over dim=1 of a 2-D (M, C) array (e.g. style vectors)."""
    M, C = int(x.shape[0]), int(x.shape[1])
    if M * C < _SMALL_2D_ELEMS:
        # Style vectors are a few KiB-MB: the fused XLA op beats a kernel launch.
        return _pixel_norm_fused(x)

    elem_bytes = jnp.dtype(x.dtype).itemsize
    budget = _vmem_budget_bytes()
    block_cap_bytes = budget // 6
    row_align = _SUBLANE * max(1, 4 // max(1, min(elem_bytes, 4)))  # 8 f32, 16 bf16
    tm_cap = max(row_align,
                 (block_cap_bytes // max(C * elem_bytes, 1)) // row_align * row_align)

    if M <= tm_cap:
        TM = M                              # full dim -> legal regardless of align
    else:
        TM = _largest_divisor_tile(M, tm_cap, row_align) or tm_cap
    n_m = pl.cdiv(M, TM)
    if n_m < 2 and M >= 2 * row_align:
        TM = _round_up(-(-M // 2), row_align)
        n_m = pl.cdiv(M, TM)

    block_bytes = TM * C * elem_bytes
    n_elems = M * C
    cost = pl.CostEstimate(flops=3 * n_elems,
                           transcendentals=M,
                           bytes_accessed=2 * n_elems * elem_bytes)

    return pl.pallas_call(
        _pixel_norm_row_kernel,
        grid=(n_m,),
        in_specs=[pl.BlockSpec((TM, C), lambda i: (i, 0))],
        out_specs=pl.BlockSpec((TM, C), lambda i: (i, 0)),
        out_shape=jax.ShapeDtypeStruct((M, C), x.dtype),
        compiler_params=pltpu.CompilerParams(
            dimension_semantics=("parallel",),
            vmem_limit_bytes=int(min(budget, max(8 * 1024 * 1024, 6 * block_bytes)))),
        cost_estimate=cost,
    )(x)


def pixel_norm(x):
    """Matches torch: input * rsqrt(mean(input**2, dim=1, keepdim=True) + 1e-8)."""
    if x.ndim < 2:
        raise ValueError("PixelNorm expects input with ndim >= 2")
    if not jnp.issubdtype(x.dtype, jnp.floating):
        x = x.astype(jnp.float32)
    if x.ndim == 2:
        return _pixel_norm_2d(x)
    return _pixel_norm_nchw(x)


def pixel_norm_ref(x):
    xf = x.astype(jnp.float32)
    return (xf * jax.lax.rsqrt(jnp.mean(xf * xf, axis=1, keepdims=True) + EPS)
            ).astype(x.dtype)


# ---------------------------------- main -------------------------------------

if __name__ == "__main__":
    key = jax.random.PRNGKey(0)
    k1, k2, k3 = jax.random.split(key, 3)

    # NCHW feature-map case (GPEN generator internals), f32.
    x = jax.random.normal(k1, (2, 4, 16, 16), jnp.float32)
    # bf16 feature map: exercises native-dtype HBM traffic + in-kernel f32 cast.
    xb = jax.random.normal(k2, (2, 8, 32, 32), jnp.float32).astype(jnp.bfloat16)
    # Style-vector case (latents) — small, served by the fused XLA fast path.
    style = jax.random.normal(k3, (2, 32), jnp.float32)

    run = jax.jit(pixel_norm)
    y = run(x)
    yb = run(xb)
    ys = run(style)
    jax.block_until_ready((y, yb, ys))

    assert y.shape == x.shape and y.dtype == x.dtype
    assert yb.shape == xb.shape and yb.dtype == xb.dtype
    assert ys.shape == style.shape and ys.dtype == style.dtype
    assert jnp.allclose(y, pixel_norm_ref(x), rtol=1e-5, atol=1e-5)
    assert jnp.allclose(yb.astype(jnp.float32), pixel_norm_ref(xb).astype(jnp.float32),
                        rtol=2e-2, atol=2e-2)
    assert jnp.allclose(ys, pixel_norm_ref(style), rtol=1e-5, atol=1e-5)

    print("KERNEL_OK")
</pallas_src>

<mosaic_0001>
module attributes {stable_mosaic.version = 11 : i64} {
  func.func @_pixel_norm_channel_kernel(%arg0: i32, %arg1: i32, %arg2: memref<1x4x256xf32, #tpu.memory_space<vmem>>, %arg3: memref<1x4x256xf32, #tpu.memory_space<vmem>>) attributes {dimension_semantics = [#tpu.dimension_semantics<parallel>, #tpu.dimension_semantics<parallel>], iteration_bounds = array<i64: 2, 1>, scalar_prefetch = 0 : i64, scratch_operands = 0 : i64, tpu.core_type = #tpu.core_type<tc>, window_params = [{transform_indices = @transform_0, window_bounds = array<i64: 1, 4, 256>}, {transform_indices = @transform_1, window_bounds = array<i64: 1, 4, 256>}]} {
    %c0 = arith.constant 0 : index
    %c0_0 = arith.constant 0 : index
    %c0_1 = arith.constant 0 : index
    %0 = vector.load %arg2[%c0, %c0_0, %c0_1] : memref<1x4x256xf32, #tpu.memory_space<vmem>>, vector<1x4x256xf32>
    %1 = vector.shape_cast %0 : vector<1x4x256xf32> to vector<4x256xf32>
    %2 = arith.mulf %1, %1 : vector<4x256xf32>
    %cst = arith.constant dense<0.000000e+00> : vector<256xf32>
    %3 = vector.multi_reduction <add>, %2, %cst [0] : vector<4x256xf32> to vector<256xf32>
    %4 = vector.shape_cast %3 : vector<256xf32> to vector<1x256xf32>
    %cst_2 = arith.constant 4.000000e+00 : f32
    %5 = vector.broadcast %cst_2 : f32 to vector<1x256xf32>
    %6 = arith.divf %4, %5 : vector<1x256xf32>
    %cst_3 = arith.constant 9.99999993E-9 : f32
    %7 = vector.broadcast %cst_3 : f32 to vector<1x256xf32>
    %8 = arith.addf %6, %7 : vector<1x256xf32>
    %9 = math.rsqrt %8 : vector<1x256xf32>
    %10 = vector.broadcast %9 : vector<1x256xf32> to vector<4x256xf32>
    %11 = arith.mulf %1, %10 : vector<4x256xf32>
    %c0_4 = arith.constant 0 : index
    %c0_5 = arith.constant 0 : index
    %c0_6 = arith.constant 0 : index
    %12 = vector.load %arg3[%c0_4, %c0_5, %c0_6] : memref<1x4x256xf32, #tpu.memory_space<vmem>>, vector<1x4x256xf32>
    %13 = vector.shape_cast %12 : vector<1x4x256xf32> to vector<4x256xf32>
    %14 = vector.shape_cast %11 : vector<4x256xf32> to vector<1x4x256xf32>
    tpu.vector_store %arg3[%c0_4, %c0_5, %c0_6], %14 {strides = array<i32>} : memref<1x4x256xf32, #tpu.memory_space<vmem>>, vector<1x4x256xf32>,
    return
  }
  func.func @transform_0(%arg0: i32, %arg1: i32) -> (i32, i32, i32) {
    %c0_i32 = arith.constant 0 : i32
    %c0_i32_0 = arith.constant 0 : i32
    return %arg0, %c0_i32, %arg1 : i32, i32, i32
  }
  func.func @transform_1(%arg0: i32, %arg1: i32) -> (i32, i32, i32) {
    %c0_i32 = arith.constant 0 : i32
    %c0_i32_0 = arith.constant 0 : i32
    return %arg0, %c0_i32, %arg1 : i32, i32, i32
  }
}

</mosaic_0001>

<llo_original>
// kernel: pixel_norm.1
$region0: #{pixel_norm.1}
  #allocation0 [shape = 'u32[]', space=smem, size = 0x4, offset = 0x4, fixed_abs, tag = 'smem constant byte address 0x4 - core index']
  #allocation1 [shape = 'u32[144,128]{1,0:T(1,128)}', space=vmem, size = 0x12000, scoped, tag = 'internal scratch']
  %s0 = inlined_call_operand.vmem [shape: f32[2,4,256], index: 0, kind: input, shape index: {}]
  %s1 = inlined_call_operand.vmem [shape: f32[2,4,256], index: 1, kind: output, shape index: {}]
  %s2 = sld [smem:[#allocation0]]
  $region37: #{pixel_norm.1} parent=0
    _
  %s4 = ssub.s32 1, %s2
  %s5 = scalar_select 0, %s4, %s2
  loop: start=0, step=1, limit=4
  $region2: #{pixel_norm.1} parent=0 // loop_pre_header
    _
  $region3: #{pixel_norm.1} parent=0 // loop_header
    %s7 = sphi 0, %s11
    %p8 = scmp.ge.s32.totalorder %s7, 4
    %s14 = sphi 0, %s26
    %s15 = sphi 0, %s22
    %s16 = sphi 0, %s14
    %s17 = sphi 0, %s15
    %s18 = sphi 0, %s16
    %s19 = sphi 0, %s17
    %s31 = sphi 0, %s33
    %s34 = sphi 0, %s31
    %s35 = sphi 0, %s34
    %s51 = sphi 0, %s35
    %s59 = sphi 0, %s61
    %s62 = sphi 0, %s59
    %s63 = sphi 0, %s62
    %s79 = sphi 0, %s63
  $region4: #{pixel_norm.1} parent=0 // loop_header_branch
    %10 = sbr.rel (%p8) target = $region8
  $region5: #{pixel_norm.1} parent=0 // loop_body
    %s12 = ssub.s32 %s7, 1
    %s13 = ssub.s32 %s7, 2
    %s20 = sadd.s32 1, %s15
    %p21 = scmp.ge.s32.totalorder %s20, 1
    %s22 = scalar_select %p21, 0, %s20
    %s23 = sadd.s32 1, %s14
    %s24 = scalar_select %p21, %s23, %s14
    %p25 = scmp.ge.s32.totalorder %s24, 2
    %s26 = scalar_select %p25, 0, %s24
    %s27 = ssub.s32 %s14, %s26
    %s28 = ssub.s32 %s15, %s22
    %s29 = sor.u32 %s27, %s28
    %p30 = scmp.eq.s32.totalorder %s29, 0
    %s32 = sadd.s32 %s31, 1
    %s33 = scalar_select %p30, %s31, %s32
    %p36 = pneg %p30
    %p37 = scmp.eq.s32.totalorder %s7, 1
    %p38 = por %p36, %p37
    %p39 = scmp.ne.s32.totalorder %s31, %s34
    %p40 = scmp.eq.s32.totalorder %s7, 0
    %p41 = por %p39, %p40
    %p42 = scmp.ne.s32.totalorder %s31, %s34
    %p43 = scmp.eq.s32.totalorder %s12, 1
    %p44 = por %p42, %p43
    %p45 = scmp.ne.s32.totalorder %s34, %s35
    %p46 = scmp.eq.s32.totalorder %s12, 0
    %p47 = por %p45, %p46
    %p48 = scmp.ne.s32.totalorder %s34, %s35
    %p49 = scmp.eq.s32.totalorder %s13, 1
    %p50 = por %p48, %p49
    %p52 = scmp.ne.s32.totalorder %s35, %s51
    %p53 = scmp.eq.s32.totalorder %s13, 0
    %p54 = por %p52, %p53
    %s55 = ssub.s32 %s14, %s26
    %s56 = ssub.s32 %s15, %s22
    %s57 = sor.u32 %s55, %s56
    %p58 = scmp.eq.s32.totalorder %s57, 0
    %s60 = sadd.s32 %s59, 1
    %s61 = scalar_select %p58, %s59, %s60
    %p64 = pneg %p58
    %p65 = scmp.eq.s32.totalorder %s7, 1
    %p66 = por %p64, %p65
    %p67 = scmp.ne.s32.totalorder %s59, %s62
    %p68 = scmp.eq.s32.totalorder %s7, 0
    %p69 = por %p67, %p68
    %p70 = scmp.ne.s32.totalorder %s59, %s62
    %p71 = scmp.eq.s32.totalorder %s12, 1
    %p72 = por %p70, %p71
    %p73 = scmp.ne.s32.totalorder %s62, %s63
    %p74 = scmp.eq.s32.totalorder %s12, 0
    %p75 = por %p73, %p74
    %p76 = scmp.ne.s32.totalorder %s62, %s63
    %p77 = scmp.eq.s32.totalorder %s13, 1
    %p78 = por %p76, %p77
    %p80 = scmp.ne.s32.totalorder %s63, %s79
    %p81 = scmp.eq.s32.totalorder %s13, 0
    %p82 = por %p80, %p81
    %p83 = scmp.le.s32.totalorder 1, %s7
    %p84 = scmp.lt.s32.totalorder %s7, 3
    %p85 = pnand %p83, %p84
    %p86 = pneg %p85
    // Predicated region
    $region9: #{pixel_norm.1} parent=5 // pred_check
      _
    $region10: #{pixel_norm.1} parent=5 // pred_check_branch
      %88 = sbr.rel (%p85) target = $region12
    $region11: #{pixel_norm.1} parent=5 // pred_region
      %s89 = ssub.s32 %s7, 1
    $region12: #{pixel_norm.1} parent=5 // pred_fallthru
      _
    %p90 = scmp.lt.s32.totalorder %s7, 2
    // Predicated region
    $region13: #{pixel_norm.1} parent=5 // pred_check
      %p91 = pneg %p90
    $region14: #{pixel_norm.1} parent=5 // pred_check_branch
      %93 = sbr.rel (%p91) target = $region16
    $region15: #{pixel_norm.1} parent=5 // pred_region
      // Predicated region
      $region17: #{pixel_norm.1} parent=15 // pred_check
        %p94 = pneg %p41
      $region18: #{pixel_norm.1} parent=15 // pred_check_branch
        %96 = sbr.rel (%p94) target = $region20
      $region19: #{pixel_norm.1} parent=15 // pred_region
        %s97 = smul.u32 2, %s15
        %p98 = scmp.lt.s32.totalorder %s14, 1
        %s99 = scalar_select %p98, %s14, 1
        %p100 = scmp.lt.s32.totalorder %s97, 1
        %s101 = scalar_select %p100, %s97, 1
        %s102 = smul.addr %s99, 2
        %s103 = sadd.s32 %s101, %s102
        %s104 = smul.addr %s103, 4
        %s105 = scalar_lea.vmem %s0, %s104
        %s106 = smul.u32 2, %s15
      $region20: #{pixel_norm.1} parent=15 // pred_fallthru
        _
    $region16: #{pixel_norm.1} parent=5 // pred_fallthru
      _
    %p107 = scmp.le.s32.totalorder 1, %s7
    %p108 = scmp.lt.s32.totalorder %s7, 3
    %p109 = pnand %p107, %p108
    %p110 = pneg %p109
    // Predicated region
    $region21: #{pixel_norm.1} parent=5 // pred_check
      _
    $region22: #{pixel_norm.1} parent=5 // pred_check_branch
      %112 = sbr.rel (%p109) target = $region24
    $region23: #{pixel_norm.1} parent=5 // pred_region
      %s113 = ssub.s32 %s7, 1
      %s114 = smul.u32 2, %s17
      %p115 = scmp.lt.s32.totalorder %s16, 1
      %s116 = scalar_select %p115, %s16, 1
      %p117 = scmp.lt.s32.totalorder %s114, 1
      %s118 = scalar_select %p117, %s114, 1
      %s119 = smul.addr %s116, 2
      %s120 = sadd.s32 %s118, %s119
      %s121 = smul.addr %s120, 4
      %s122 = scalar_lea.vmem %s0, %s121
      %p123 = pneg %p47
      %p124 = pneg %p44
      %p125 = pneg %p75
      %p126 = pneg %p72
      %s127 = smul.u32 2, %s17
      %p128 = scmp.lt.s32.totalorder %s16, 1
      %s129 = scalar_select %p128, %s16, 1
      %p130 = scmp.lt.s32.totalorder %s127, 1
      %s131 = scalar_select %p130, %s127, 1
      %s132 = smul.addr %s129, 2
      %s133 = sadd.s32 %s131, %s132
      %s134 = smul.addr %s133, 4
      %s135 = scalar_lea.vmem %s1, %s134
      %s136 = smul.u32 2, %s17
      %p137 = scmp.lt.s32.totalorder %s16, 1
      %s138 = scalar_select %p137, %s16, 1
      %p139 = scmp.lt.s32.totalorder %s136, 1
      %s140 = scalar_select %p139, %s136, 1
      %s141 = smul.addr %s138, 2
      %s142 = sadd.s32 %s140, %s141
      %s143 = smul.addr %s142, 4
      %s144 = scalar_lea.vmem %s0, %s143
      %s145 = smul.u32 2, %s17
      %s146 = smul.u32 2, %s17
      %p147 = scmp.lt.s32.totalorder %s16, 1
      %s148 = scalar_select %p147, %s16, 1
      %p149 = scmp.lt.s32.totalorder %s146, 1
      %s150 = scalar_select %p149, %s146, 1
      %s151 = smul.addr %s148, 2
      %s152 = sadd.s32 %s150, %s151
      %s153 = smul.addr %s152, 4
      %s154 = scalar_lea.vmem %s1, %s153
      %s155 = smul.u32 2, %s17
      %v156 = vld [vmem:[%s144] sm:$0xff]
      %v157 = vmul.f32 %v156, %v156
      %v159 = vcombine.high %v157, %v157
      %vm161 = vcmask 1043456
      %v162 = vsel %vm161, %v157, 0.0
      %v163 = vrot.slane %v162, 4
      %v164 = vadd.f32 %v162, %v163
      %v165 = vrot.slane %v164, 2
      %v166 = vadd.f32 %v164, %v165
      %v167 = vrot.slane %v166, 1
      %v168 = vadd.f32 %v166, %v167
      %v169 = vsel %vm161, %v159, 0.0
      %v170 = vrot.slane %v169, 4
      %v171 = vadd.f32 %v169, %v170
      %v172 = vrot.slane %v171, 2
      %v173 = vadd.f32 %v171, %v172
      %v174 = vrot.slane %v173, 1
      %v175 = vadd.f32 %v173, %v174
      %v176 = vrcp.pop 4.0
      %v177 = vmul.f32 %v168, %v176
      %v178 = vmul.f32 %v175, %v176
      %v179 = vadd.f32 %v177, 1e-08
      %v180 = vadd.f32 %v178, 1e-08
      %v181 = vrsqrt.pop %v179
      %v182 = vrsqrt.pop %v180
      %v185 = vcombine.low %v181, %v182
      %v187 = vmul.f32 %v156, %v185
      %188 = vst [vmem:[%s154] sm:$0xff] %v187
      %s189 = smul.u32 2, %s17
      %p190 = scmp.lt.s32.totalorder %s16, 1
      %s191 = scalar_select %p190, %s16, 1
      %p192 = scmp.lt.s32.totalorder %s189, 1
      %s193 = scalar_select %p192, %s189, 1
      %s194 = smul.addr %s191, 2
      %s195 = sadd.s32 %s193, %s194
      %s196 = smul.addr %s195, 4
      %s197 = scalar_lea.vmem %s1, %s196
      // Predicated region
      $region25: #{pixel_norm.1} parent=23 // pred_check
        %p198 = pneg %p72
      $region26: #{pixel_norm.1} parent=23 // pred_check_branch
        %200 = sbr.rel (%p198) target = $region28
      $region27: #{pixel_norm.1} parent=23 // pred_region
        %s201 = smul.u32 2, %s17
      $region28: #{pixel_norm.1} parent=23 // pred_fallthru
        _
    $region24: #{pixel_norm.1} parent=5 // pred_fallthru
      _
    %p202 = scmp.le.s32.totalorder 2, %s7
    // Predicated region
    $region29: #{pixel_norm.1} parent=5 // pred_check
      %p203 = pneg %p202
    $region30: #{pixel_norm.1} parent=5 // pred_check_branch
      %205 = sbr.rel (%p203) target = $region32
    $region31: #{pixel_norm.1} parent=5 // pred_region
      %s206 = ssub.s32 %s7, 2
      // Predicated region
      $region33: #{pixel_norm.1} parent=31 // pred_check
        %p207 = pneg %p78
      $region34: #{pixel_norm.1} parent=31 // pred_check_branch
        %209 = sbr.rel (%p207) target = $region36
      $region35: #{pixel_norm.1} parent=31 // pred_region
        %s210 = smul.u32 2, %s19
        %p211 = scmp.lt.s32.totalorder %s18, 1
        %s212 = scalar_select %p211, %s18, 1
        %p213 = scmp.lt.s32.totalorder %s210, 1
        %s214 = scalar_select %p213, %s210, 1
        %s215 = smul.addr %s212, 2
        %s216 = sadd.s32 %s214, %s215
        %s217 = smul.addr %s216, 4
        %s218 = scalar_lea.vmem %s1, %s217
      $region36: #{pixel_norm.1} parent=31 // pred_fallthru
        _
    $region32: #{pixel_norm.1} parent=5 // pred_fallthru
      _
  $region6: #{pixel_norm.1} parent=0 // loop_footer
    %s11 = sadd.s32 1, %s7
  $region7: #{pixel_norm.1} parent=0 // loop_footer_branch
    %6 = sbr.rel target = $region3
  $region8: #{pixel_norm.1} parent=0 // loop_exit
    _

</llo_original>
